<compile_context>
chip_gen: v7x
topology: tpu7x:2x2x1
jax: 0.10.0
libtpu: 0.0.40
codegen_flags: <defaults>
</compile_context>

<pallas_src>
import functools

import jax
import jax.numpy as jnp
from jax import lax
from jax.experimental import pallas as pl
from jax.experimental.pallas import tpu as pltpu


HIDDEN = 32       # lstm_hidden_dim
FC3_DIM = 32
INPUT_DIM = 1
TIME_CHUNK = 256  # timesteps per grid step (v5e/v6e can raise this; see notes)
BATCH_TILE = 64   # batch rows per grid step (keeps gates_in scratch ~8 MiB)


def lstm_kernel(x_ref, wrow_ref, bias_ref, whh_ref, w3_ref, b3_ref, w4_ref,
                b4_ref, out_ref, h_scr, c_scr, gin_scr, *, tail_steps, unroll):
    """One grid step = (batch tile, time chunk); recurrence runs in-kernel."""
    c_idx = pl.program_id(1)
    n_chunks = pl.num_programs(1)
    H = h_scr.shape[-1]
    T = gin_scr.shape[0]           # timesteps per full chunk (static)

    @pl.when(c_idx == 0)
    def _():
        h_scr[...] = jnp.zeros_like(h_scr)
        c_scr[...] = jnp.zeros_like(c_scr)
        out_ref[...] = jnp.zeros_like(out_ref)   # init resident output block

    # Input projection for the whole chunk: x_t * W_ih_row + (b_ih + b_hh).
    # Done once per chunk into VMEM scratch, off the serial dependence chain.
    gin_scr[...] = x_ref[...][:, :, None] * wrow_ref[...] + bias_ref[...]

    whh = whh_ref[...]             # (H, 4H) bf16; hoisted out of the step loop
    # TODO(synk): weight-stationary MXU (pltpu.matmul_push_rhs once per chunk
    # + matmul_acc_lhs per step) could further cut per-step staging, but the
    # MRB path needs verification on v7x, so the portable jnp.dot is kept.

    def step(t, carry):
        h, c = carry
        # Only the recurrent matmul sits on the serial per-timestep chain.
        gates = gin_scr[t] + jnp.dot(h.astype(jnp.bfloat16), whh,
                                     preferred_element_type=jnp.float32)
        sig = jax.nn.sigmoid(gates)            # one full-vreg EUP pass (128 lanes)
        tnh = jnp.tanh(gates)                  # one full-vreg EUP pass
        i_g = sig[:, 0 * H:1 * H]              # PyTorch gate order: i, f, g, o
        f_g = sig[:, 1 * H:2 * H]
        g_g = tnh[:, 2 * H:3 * H]
        o_g = sig[:, 3 * H:4 * H]
        c_new = f_g * c + i_g * g_g
        h_new = o_g * jnp.tanh(c_new)
        return h_new, c_new

    def run_steps(nsteps):
        h, c = lax.fori_loop(0, nsteps, step, (h_scr[...], c_scr[...]),
                             unroll=max(1, min(nsteps, unroll)))
        h_scr[...] = h
        c_scr[...] = c

    if tail_steps == T:
        # No padded tail: every chunk runs the full static trip count.
        run_steps(T)
    else:
        @pl.when(c_idx < n_chunks - 1)
        def _():
            run_steps(T)

        @pl.when(c_idx == n_chunks - 1)
        def _():
            run_steps(tail_steps)   # static shorter trip count; no masking

    @pl.when(c_idx == n_chunks - 1)
    def _():
        # MLP head on the final hidden state (h[-1] in the torch module).
        h = h_scr[...]
        z = jnp.dot(h, w3_ref[...], preferred_element_type=jnp.float32) + b3_ref[...]
        z = jnp.maximum(z, 0.0)                                          # ReLU
        logit = jnp.dot(z, w4_ref[...], preferred_element_type=jnp.float32) + b4_ref[...]
        out_ref[...] = jax.nn.sigmoid(logit).astype(out_ref.dtype)


def lstm_forward(x, params, *, time_chunk=TIME_CHUNK, batch_tile=BATCH_TILE,
                 unroll=16):
    """x: (B, S, 1) float32 batch-first.  Returns (B,) sigmoid outputs."""
    B, S, I = x.shape
    assert I == INPUT_DIM
    H = HIDDEN

    # ---- batch tiling: pad to a sublane multiple, split into tiles ---------
    b_pad8 = max(8, ((B + 7) // 8) * 8)
    b_tile = min(b_pad8, max(8, (batch_tile // 8) * 8))
    n_bt = (b_pad8 + b_tile - 1) // b_tile
    Bp = n_bt * b_tile

    # ---- time chunking: T steps per grid step, static tail trip count ------
    T = min(time_chunk, S)
    if T < S:
        T = max(8, (T // 8) * 8)          # sublane-aligned chunks when chunking
    n_chunks = (S + T - 1) // T
    S_pad = n_chunks * T
    tail_steps = S - (n_chunks - 1) * T   # in [1, T], static

    # Raw time-major input only (no 128x gates_in inflation in HBM).
    x_tm = x[..., 0].T.astype(jnp.float32)                           # (S, B)
    x_tm = jnp.pad(x_tm, ((0, S_pad - S), (0, Bp - B)))
    x3 = x_tm.reshape(S_pad, n_bt, b_tile).transpose(1, 0, 2)        # (n_bt, S_pad, b_tile)

    wrow = params["w_ih"][:, 0].astype(jnp.float32).reshape(1, 1, 4 * H)
    bias = (params["b_ih"] + params["b_hh"]).astype(jnp.float32).reshape(1, 1, 4 * H)
    whh_t = params["w_hh"].T.astype(jnp.bfloat16)                    # (H, 4H) bf16 (MXU)
    w3_t = params["w_fc3"].T.astype(jnp.float32)                     # (H, 32)
    b3 = params["b_fc3"].reshape(1, FC3_DIM).astype(jnp.float32)     # (1, 32)
    w4_t = params["w_fc4"].T.astype(jnp.float32)                     # (32, 1)
    b4 = params["b_fc4"].reshape(1, 1).astype(jnp.float32)           # (1, 1)

    kernel = functools.partial(lstm_kernel, tail_steps=tail_steps, unroll=unroll)

    out = pl.pallas_call(
        kernel,
        out_shape=jax.ShapeDtypeStruct((Bp, 1), jnp.float32),
        grid_spec=pltpu.PrefetchScalarGridSpec(
            num_scalar_prefetch=0,
            grid=(n_bt, n_chunks),                 # (parallel batch, serial time)
            in_specs=[
                pl.BlockSpec((None, T, b_tile), lambda b, c: (b, c, 0)),  # x chunk
                pl.BlockSpec((1, 1, 4 * H), lambda b, c: (0, 0, 0)),      # W_ih row
                pl.BlockSpec((1, 1, 4 * H), lambda b, c: (0, 0, 0)),      # b_ih + b_hh
                pl.BlockSpec((H, 4 * H), lambda b, c: (0, 0)),            # W_hh^T (bf16)
                pl.BlockSpec((H, FC3_DIM), lambda b, c: (0, 0)),          # W_fc3^T
                pl.BlockSpec((1, FC3_DIM), lambda b, c: (0, 0)),          # b_fc3
                pl.BlockSpec((FC3_DIM, 1), lambda b, c: (0, 0)),          # W_fc4^T
                pl.BlockSpec((1, 1), lambda b, c: (0, 0)),                # b_fc4
            ],
            out_specs=pl.BlockSpec((b_tile, 1), lambda b, c: (b, 0)),     # resident over c
            scratch_shapes=[
                pltpu.VMEM((b_tile, H), jnp.float32),            # h carry
                pltpu.VMEM((b_tile, H), jnp.float32),            # c carry
                pltpu.VMEM((T, b_tile, 4 * H), jnp.float32),     # per-chunk gates_in
            ],
        ),
        compiler_params=pltpu.CompilerParams(
            # Batch tiles are independent (v7x: sharded across the 2 TCs);
            # the time-chunk recurrence is serial.
            dimension_semantics=("parallel", "arbitrary"),
            # Safe on every generation incl. v7x (64 MiB physical VMEM); the
            # dominant user is the (T, b_tile, 4H) gates_in scratch (~8 MiB
            # at the defaults).  v5e/v6e can raise time_chunk and this limit.
            vmem_limit_bytes=32 * 1024 * 1024,
        ),
    )(x3, wrow, bias, whh_t, w3_t, b3, w4_t, b4)

    return out[:B, 0]   # .squeeze() as in the PyTorch module


def init_params(key):
    """Deterministic synthetic init with the same shapes as the torch module."""
    H = HIDDEN
    ks = jax.random.split(key, 8)
    u = lambda k, shape, scale: jax.random.uniform(
        k, shape, jnp.float32, minval=-scale, maxval=scale)
    s_lstm = 1.0 / jnp.sqrt(H)
    return {
        "w_ih": u(ks[0], (4 * H, INPUT_DIM), s_lstm),   # weight_ih_l0
        "w_hh": u(ks[1], (4 * H, H), s_lstm),           # weight_hh_l0
        "b_ih": u(ks[2], (4 * H,), s_lstm),             # bias_ih_l0
        "b_hh": u(ks[3], (4 * H,), s_lstm),             # bias_hh_l0
        "w_fc3": u(ks[4], (FC3_DIM, H), 1.0 / jnp.sqrt(H)),
        "b_fc3": u(ks[5], (FC3_DIM,), 1.0 / jnp.sqrt(H)),
        "w_fc4": u(ks[6], (1, FC3_DIM), 1.0 / jnp.sqrt(FC3_DIM)),
        "b_fc4": u(ks[7], (1,), 1.0 / jnp.sqrt(FC3_DIM)),
    }


def reference_forward(x, params):
    """Pure-JAX f32 reference (lax.scan LSTM) for correctness checking."""
    H = HIDDEN
    B = x.shape[0]
    x_tm = jnp.transpose(x, (1, 0, 2))                  # (S, B, 1)

    def step(carry, x_t):
        h, c = carry
        gates = (x_t @ params["w_ih"].T + params["b_ih"]
                 + h @ params["w_hh"].T + params["b_hh"])
        i = jax.nn.sigmoid(gates[:, 0 * H:1 * H])
        f = jax.nn.sigmoid(gates[:, 1 * H:2 * H])
        g = jnp.tanh(gates[:, 2 * H:3 * H])
        o = jax.nn.sigmoid(gates[:, 3 * H:4 * H])
        c = f * c + i * g
        h = o * jnp.tanh(c)
        return (h, c), None

    h0 = jnp.zeros((B, H), jnp.float32)
    c0 = jnp.zeros((B, H), jnp.float32)
    (h, _), _ = jax.lax.scan(step, (h0, c0), x_tm)
    z = jax.nn.relu(h @ params["w_fc3"].T + params["b_fc3"])
    return jax.nn.sigmoid(z @ params["w_fc4"].T + params["b_fc4"])[:, 0]


if __name__ == "__main__":
    key = jax.random.PRNGKey(0)
    k_param, k_x1, k_x2 = jax.random.split(key, 3)
    params = init_params(k_param)

    # Case 1: single batch tile, single time chunk (B=4, S=8).
    B1, S1 = 4, 8
    x1 = jax.random.normal(k_x1, (B1, S1, INPUT_DIM), jnp.float32)
    out1 = jax.block_until_ready(lstm_forward(x1, params))
    ref1 = jax.block_until_ready(reference_forward(x1, params))
    assert out1.shape == (B1,)
    # bf16 MXU operands on the recurrence -> small drift vs the f32 reference.
    assert jnp.allclose(out1, ref1, atol=2e-2, rtol=2e-2), (out1, ref1)

    # Case 2: multiple batch tiles, multiple time chunks, partial tail chunk.
    B2, S2 = 12, 20
    x2 = jax.random.normal(k_x2, (B2, S2, INPUT_DIM), jnp.float32)
    out2 = jax.block_until_ready(
        lstm_forward(x2, params, time_chunk=8, batch_tile=8))
    ref2 = jax.block_until_ready(reference_forward(x2, params))
    assert out2.shape == (B2,)
    assert jnp.allclose(out2, ref2, atol=2e-2, rtol=2e-2), (out2, ref2)

    print("KERNEL_OK")
</pallas_src>

<mosaic_0001>
module attributes {stable_mosaic.version = 11 : i64} {
  func.func @lstm_kernel(%arg0: i32, %arg1: i32, %arg2: memref<1x8x8xf32, #tpu.memory_space<vmem>>, %arg3: memref<1x1x128xf32, #tpu.memory_space<vmem>>, %arg4: memref<1x1x128xf32, #tpu.memory_space<vmem>>, %arg5: memref<32x128xbf16, #tpu.memory_space<vmem>>, %arg6: memref<32x32xf32, #tpu.memory_space<vmem>>, %arg7: memref<1x32xf32, #tpu.memory_space<vmem>>, %arg8: memref<32x1xf32, #tpu.memory_space<vmem>>, %arg9: memref<1x1xf32, #tpu.memory_space<vmem>>, %arg10: memref<8x1xf32, #tpu.memory_space<vmem>>, %arg11: memref<8x32xf32, #tpu.memory_space<vmem>>, %arg12: memref<8x32xf32, #tpu.memory_space<vmem>>, %arg13: memref<8x8x128xf32, #tpu.memory_space<vmem>>) attributes {dimension_semantics = [#tpu.dimension_semantics<parallel>, #tpu.dimension_semantics<arbitrary>], iteration_bounds = array<i64: 1, 1>, scalar_prefetch = 0 : i64, scratch_operands = 3 : i64, tpu.core_type = #tpu.core_type<tc>, window_params = [{transform_indices = @transform_0, window_bounds = array<i64: 1, 8, 8>}, {pipeline_mode = #tpu.pipeline_mode<synchronous>, transform_indices = @transform_1, window_bounds = array<i64: 1, 1, 128>}, {pipeline_mode = #tpu.pipeline_mode<synchronous>, transform_indices = @transform_2, window_bounds = array<i64: 1, 1, 128>}, {pipeline_mode = #tpu.pipeline_mode<synchronous>, transform_indices = @transform_3, window_bounds = array<i64: 32, 128>}, {pipeline_mode = #tpu.pipeline_mode<synchronous>, transform_indices = @transform_4, window_bounds = array<i64: 32, 32>}, {pipeline_mode = #tpu.pipeline_mode<synchronous>, transform_indices = @transform_5, window_bounds = array<i64: 1, 32>}, {pipeline_mode = #tpu.pipeline_mode<synchronous>, transform_indices = @transform_6, window_bounds = array<i64: 32, 1>}, {pipeline_mode = #tpu.pipeline_mode<synchronous>, transform_indices = @transform_7, window_bounds = array<i64: 1, 1>}, {transform_indices = @transform_8, window_bounds = array<i64: 8, 1>}]} {
    %c0_i32 = arith.constant 0 : i32
    %0 = arith.cmpi eq, %arg1, %c0_i32 : i32
    %1 = arith.extui %0 : i1 to i32
    %c0_i32_0 = arith.constant 0 : i32
    %2 = arith.cmpi ne, %1, %c0_i32_0 : i32
    scf.if %2 {
      %cst_56 = arith.constant 0.000000e+00 : f32
      %190 = vector.broadcast %cst_56 : f32 to vector<8x32xf32>
      %c0_57 = arith.constant 0 : index
      %c0_58 = arith.constant 0 : index
      %191 = vector.load %arg11[%c0_57, %c0_58] : memref<8x32xf32, #tpu.memory_space<vmem>>, vector<8x32xf32>
      tpu.vector_store %arg11[%c0_57, %c0_58], %190 {strides = array<i32>} : memref<8x32xf32, #tpu.memory_space<vmem>>, vector<8x32xf32>,
      %cst_59 = arith.constant 0.000000e+00 : f32
      %192 = vector.broadcast %cst_59 : f32 to vector<8x32xf32>
      %c0_60 = arith.constant 0 : index
      %c0_61 = arith.constant 0 : index
      %193 = vector.load %arg12[%c0_60, %c0_61] : memref<8x32xf32, #tpu.memory_space<vmem>>, vector<8x32xf32>
      tpu.vector_store %arg12[%c0_60, %c0_61], %192 {strides = array<i32>} : memref<8x32xf32, #tpu.memory_space<vmem>>, vector<8x32xf32>,
      %cst_62 = arith.constant 0.000000e+00 : f32
      %194 = vector.broadcast %cst_62 : f32 to vector<8x1xf32>
      %c0_63 = arith.constant 0 : index
      %c0_64 = arith.constant 0 : index
      %195 = vector.load %arg10[%c0_63, %c0_64] : memref<8x1xf32, #tpu.memory_space<vmem>>, vector<8x1xf32>
      tpu.vector_store %arg10[%c0_63, %c0_64], %194 {strides = array<i32>} : memref<8x1xf32, #tpu.memory_space<vmem>>, vector<8x1xf32>,
    } else {
    }
    %c0 = arith.constant 0 : index
    %c0_1 = arith.constant 0 : index
    %c0_2 = arith.constant 0 : index
    %3 = vector.load %arg2[%c0, %c0_1, %c0_2] : memref<1x8x8xf32, #tpu.memory_space<vmem>>, vector<1x8x8xf32>
    %4 = vector.shape_cast %3 : vector<1x8x8xf32> to vector<8x8xf32>
    %5 = vector.shape_cast %4 : vector<8x8xf32> to vector<8x8x1xf32>
    %c0_3 = arith.constant 0 : index
    %c0_4 = arith.constant 0 : index
    %c0_5 = arith.constant 0 : index
    %6 = vector.load %arg3[%c0_3, %c0_4, %c0_5] : memref<1x1x128xf32, #tpu.memory_space<vmem>>, vector<1x1x128xf32>
    %7 = vector.broadcast %5 : vector<8x8x1xf32> to vector<8x8x128xf32>
    %8 = vector.broadcast %6 : vector<1x1x128xf32> to vector<8x8x128xf32>
    %9 = arith.mulf %7, %8 : vector<8x8x128xf32>
    %c0_6 = arith.constant 0 : index
    %c0_7 = arith.constant 0 : index
    %c0_8 = arith.constant 0 : index
    %10 = vector.load %arg4[%c0_6, %c0_7, %c0_8] : memref<1x1x128xf32, #tpu.memory_space<vmem>>, vector<1x1x128xf32>
    %11 = vector.broadcast %10 : vector<1x1x128xf32> to vector<8x8x128xf32>
    %12 = arith.addf %9, %11 : vector<8x8x128xf32>
    %c0_9 = arith.constant 0 : index
    %c0_10 = arith.constant 0 : index
    %c0_11 = arith.constant 0 : index
    %13 = vector.load %arg13[%c0_9, %c0_10, %c0_11] : memref<8x8x128xf32, #tpu.memory_space<vmem>>, vector<8x8x128xf32>
    tpu.vector_store %arg13[%c0_9, %c0_10, %c0_11], %12 {strides = array<i32>} : memref<8x8x128xf32, #tpu.memory_space<vmem>>, vector<8x8x128xf32>,
    %c0_12 = arith.constant 0 : index
    %c0_13 = arith.constant 0 : index
    %14 = vector.load %arg5[%c0_12, %c0_13] : memref<32x128xbf16, #tpu.memory_space<vmem>>, vector<32x128xbf16>
    %c0_14 = arith.constant 0 : index
    %c0_15 = arith.constant 0 : index
    %15 = vector.load %arg11[%c0_14, %c0_15] : memref<8x32xf32, #tpu.memory_space<vmem>>, vector<8x32xf32>
    %c0_16 = arith.constant 0 : index
    %c0_17 = arith.constant 0 : index
    %16 = vector.load %arg12[%c0_16, %c0_17] : memref<8x32xf32, #tpu.memory_space<vmem>>, vector<8x32xf32>
    %c0_i32_18 = arith.constant 0 : i32
    %17 = arith.index_cast %c0_i32_18 : i32 to index
    %c0_19 = arith.constant 0 : index
    %c0_20 = arith.constant 0 : index
    %18 = vector.load %arg13[%17, %c0_19, %c0_20] : memref<8x8x128xf32, #tpu.memory_space<vmem>>, vector<1x8x128xf32>
    %19 = vector.shape_cast %18 : vector<1x8x128xf32> to vector<8x128xf32>
    %20 = arith.truncf %15 : vector<8x32xf32> to vector<8x32xbf16>
    %cst = arith.constant dense<0.000000e+00> : vector<8x128xf32>
    %21 = tpu.matmul %20, %14, %cst {dimension_numbers = #tpu.dot_dimension_numbers<[1], [0], [0], [1], [0, 0, 1, 1], [], []>} : vector<8x32xbf16>, vector<32x128xbf16>, vector<8x128xf32> -> vector<8x128xf32>
    %22 = arith.addf %19, %21 : vector<8x128xf32>
    %23 = arith.negf %22 : vector<8x128xf32>
    %24 = math.exp %23 : vector<8x128xf32>
    %cst_21 = arith.constant 1.000000e+00 : f32
    %25 = vector.broadcast %cst_21 : f32 to vector<8x128xf32>
    %26 = arith.addf %25, %24 : vector<8x128xf32>
    %27 = arith.divf %25, %26 : vector<8x128xf32>
    %28 = math.tanh %22 : vector<8x128xf32>
    %29 = vector.extract_strided_slice %27 {offsets = [0, 0], sizes = [8, 32], strides = [1, 1]} : vector<8x128xf32> to vector<8x32xf32>
    %30 = vector.extract_strided_slice %27 {offsets = [0, 32], sizes = [8, 32], strides = [1, 1]} : vector<8x128xf32> to vector<8x32xf32>
    %31 = vector.extract_strided_slice %28 {offsets = [0, 64], sizes = [8, 32], strides = [1, 1]} : vector<8x128xf32> to vector<8x32xf32>
    %32 = vector.extract_strided_slice %27 {offsets = [0, 96], sizes = [8, 32], strides = [1, 1]} : vector<8x128xf32> to vector<8x32xf32>
    %33 = arith.mulf %30, %16 : vector<8x32xf32>
    %34 = arith.mulf %29, %31 : vector<8x32xf32>
    %35 = arith.addf %33, %34 : vector<8x32xf32>
    %36 = math.tanh %35 : vector<8x32xf32>
    %37 = arith.mulf %32, %36 : vector<8x32xf32>
    %c1_i32 = arith.constant 1 : i32
    %38 = arith.index_cast %c1_i32 : i32 to index
    %c0_22 = arith.constant 0 : index
    %c0_23 = arith.constant 0 : index
    %39 = vector.load %arg13[%38, %c0_22, %c0_23] : memref<8x8x128xf32, #tpu.memory_space<vmem>>, vector<1x8x128xf32>
    %40 = vector.shape_cast %39 : vector<1x8x128xf32> to vector<8x128xf32>
    %41 = arith.truncf %37 : vector<8x32xf32> to vector<8x32xbf16>
    %cst_24 = arith.constant dense<0.000000e+00> : vector<8x128xf32>
    %42 = tpu.matmul %41, %14, %cst_24 {dimension_numbers = #tpu.dot_dimension_numbers<[1], [0], [0], [1], [0, 0, 1, 1], [], []>} : vector<8x32xbf16>, vector<32x128xbf16>, vector<8x128xf32> -> vector<8x128xf32>
    %43 = arith.addf %40, %42 : vector<8x128xf32>
    %44 = arith.negf %43 : vector<8x128xf32>
    %45 = math.exp %44 : vector<8x128xf32>
    %cst_25 = arith.constant 1.000000e+00 : f32
    %46 = vector.broadcast %cst_25 : f32 to vector<8x128xf32>
    %47 = arith.addf %46, %45 : vector<8x128xf32>
    %48 = arith.divf %46, %47 : vector<8x128xf32>
    %49 = math.tanh %43 : vector<8x128xf32>
    %50 = vector.extract_strided_slice %48 {offsets = [0, 0], sizes = [8, 32], strides = [1, 1]} : vector<8x128xf32> to vector<8x32xf32>
    %51 = vector.extract_strided_slice %48 {offsets = [0, 32], sizes = [8, 32], strides = [1, 1]} : vector<8x128xf32> to vector<8x32xf32>
    %52 = vector.extract_strided_slice %49 {offsets = [0, 64], sizes = [8, 32], strides = [1, 1]} : vector<8x128xf32> to vector<8x32xf32>
    %53 = vector.extract_strided_slice %48 {offsets = [0, 96], sizes = [8, 32], strides = [1, 1]} : vector<8x128xf32> to vector<8x32xf32>
    %54 = arith.mulf %51, %35 : vector<8x32xf32>
    %55 = arith.mulf %50, %52 : vector<8x32xf32>
    %56 = arith.addf %54, %55 : vector<8x32xf32>
    %57 = math.tanh %56 : vector<8x32xf32>
    %58 = arith.mulf %53, %57 : vector<8x32xf32>
    %c2_i32 = arith.constant 2 : i32
    %59 = arith.index_cast %c2_i32 : i32 to index
    %c0_26 = arith.constant 0 : index
    %c0_27 = arith.constant 0 : index
    %60 = vector.load %arg13[%59, %c0_26, %c0_27] : memref<8x8x128xf32, #tpu.memory_space<vmem>>, vector<1x8x128xf32>
    %61 = vector.shape_cast %60 : vector<1x8x128xf32> to vector<8x128xf32>
    %62 = arith.truncf %58 : vector<8x32xf32> to vector<8x32xbf16>
    %cst_28 = arith.constant dense<0.000000e+00> : vector<8x128xf32>
    %63 = tpu.matmul %62, %14, %cst_28 {dimension_numbers = #tpu.dot_dimension_numbers<[1], [0], [0], [1], [0, 0, 1, 1], [], []>} : vector<8x32xbf16>, vector<32x128xbf16>, vector<8x128xf32> -> vector<8x128xf32>
    %64 = arith.addf %61, %63 : vector<8x128xf32>
    %65 = arith.negf %64 : vector<8x128xf32>
    %66 = math.exp %65 : vector<8x128xf32>
    %cst_29 = arith.constant 1.000000e+00 : f32
    %67 = vector.broadcast %cst_29 : f32 to vector<8x128xf32>
    %68 = arith.addf %67, %66 : vector<8x128xf32>
    %69 = arith.divf %67, %68 : vector<8x128xf32>
    %70 = math.tanh %64 : vector<8x128xf32>
    %71 = vector.extract_strided_slice %69 {offsets = [0, 0], sizes = [8, 32], strides = [1, 1]} : vector<8x128xf32> to vector<8x32xf32>
    %72 = vector.extract_strided_slice %69 {offsets = [0, 32], sizes = [8, 32], strides = [1, 1]} : vector<8x128xf32> to vector<8x32xf32>
    %73 = vector.extract_strided_slice %70 {offsets = [0, 64], sizes = [8, 32], strides = [1, 1]} : vector<8x128xf32> to vector<8x32xf32>
    %74 = vector.extract_strided_slice %69 {offsets = [0, 96], sizes = [8, 32], strides = [1, 1]} : vector<8x128xf32> to vector<8x32xf32>
    %75 = arith.mulf %72, %56 : vector<8x32xf32>
    %76 = arith.mulf %71, %73 : vector<8x32xf32>
    %77 = arith.addf %75, %76 : vector<8x32xf32>
    %78 = math.tanh %77 : vector<8x32xf32>
    %79 = arith.mulf %74, %78 : vector<8x32xf32>
    %c3_i32 = arith.constant 3 : i32
    %80 = arith.index_cast %c3_i32 : i32 to index
    %c0_30 = arith.constant 0 : index
    %c0_31 = arith.constant 0 : index
    %81 = vector.load %arg13[%80, %c0_30, %c0_31] : memref<8x8x128xf32, #tpu.memory_space<vmem>>, vector<1x8x128xf32>
    %82 = vector.shape_cast %81 : vector<1x8x128xf32> to vector<8x128xf32>
    %83 = arith.truncf %79 : vector<8x32xf32> to vector<8x32xbf16>
    %cst_32 = arith.constant dense<0.000000e+00> : vector<8x128xf32>
    %84 = tpu.matmul %83, %14, %cst_32 {dimension_numbers = #tpu.dot_dimension_numbers<[1], [0], [0], [1], [0, 0, 1, 1], [], []>} : vector<8x32xbf16>, vector<32x128xbf16>, vector<8x128xf32> -> vector<8x128xf32>
    %85 = arith.addf %82, %84 : vector<8x128xf32>
    %86 = arith.negf %85 : vector<8x128xf32>
    %87 = math.exp %86 : vector<8x128xf32>
    %cst_33 = arith.constant 1.000000e+00 : f32
    %88 = vector.broadcast %cst_33 : f32 to vector<8x128xf32>
    %89 = arith.addf %88, %87 : vector<8x128xf32>
    %90 = arith.divf %88, %89 : vector<8x128xf32>
    %91 = math.tanh %85 : vector<8x128xf32>
    %92 = vector.extract_strided_slice %90 {offsets = [0, 0], sizes = [8, 32], strides = [1, 1]} : vector<8x128xf32> to vector<8x32xf32>
    %93 = vector.extract_strided_slice %90 {offsets = [0, 32], sizes = [8, 32], strides = [1, 1]} : vector<8x128xf32> to vector<8x32xf32>
    %94 = vector.extract_strided_slice %91 {offsets = [0, 64], sizes = [8, 32], strides = [1, 1]} : vector<8x128xf32> to vector<8x32xf32>
    %95 = vector.extract_strided_slice %90 {offsets = [0, 96], sizes = [8, 32], strides = [1, 1]} : vector<8x128xf32> to vector<8x32xf32>
    %96 = arith.mulf %93, %77 : vector<8x32xf32>
    %97 = arith.mulf %92, %94 : vector<8x32xf32>
    %98 = arith.addf %96, %97 : vector<8x32xf32>
    %99 = math.tanh %98 : vector<8x32xf32>
    %100 = arith.mulf %95, %99 : vector<8x32xf32>
    %c4_i32 = arith.constant 4 : i32
    %101 = arith.index_cast %c4_i32 : i32 to index
    %c0_34 = arith.constant 0 : index
    %c0_35 = arith.constant 0 : index
    %102 = vector.load %arg13[%101, %c0_34, %c0_35] : memref<8x8x128xf32, #tpu.memory_space<vmem>>, vector<1x8x128xf32>
    %103 = vector.shape_cast %102 : vector<1x8x128xf32> to vector<8x128xf32>
    %104 = arith.truncf %100 : vector<8x32xf32> to vector<8x32xbf16>
    %cst_36 = arith.constant dense<0.000000e+00> : vector<8x128xf32>
    %105 = tpu.matmul %104, %14, %cst_36 {dimension_numbers = #tpu.dot_dimension_numbers<[1], [0], [0], [1], [0, 0, 1, 1], [], []>} : vector<8x32xbf16>, vector<32x128xbf16>, vector<8x128xf32> -> vector<8x128xf32>
    %106 = arith.addf %103, %105 : vector<8x128xf32>
    %107 = arith.negf %106 : vector<8x128xf32>
    %108 = math.exp %107 : vector<8x128xf32>
    %cst_37 = arith.constant 1.000000e+00 : f32
    %109 = vector.broadcast %cst_37 : f32 to vector<8x128xf32>
    %110 = arith.addf %109, %108 : vector<8x128xf32>
    %111 = arith.divf %109, %110 : vector<8x128xf32>
    %112 = math.tanh %106 : vector<8x128xf32>
    %113 = vector.extract_strided_slice %111 {offsets = [0, 0], sizes = [8, 32], strides = [1, 1]} : vector<8x128xf32> to vector<8x32xf32>
    %114 = vector.extract_strided_slice %111 {offsets = [0, 32], sizes = [8, 32], strides = [1, 1]} : vector<8x128xf32> to vector<8x32xf32>
    %115 = vector.extract_strided_slice %112 {offsets = [0, 64], sizes = [8, 32], strides = [1, 1]} : vector<8x128xf32> to vector<8x32xf32>
    %116 = vector.extract_strided_slice %111 {offsets = [0, 96], sizes = [8, 32], strides = [1, 1]} : vector<8x128xf32> to vector<8x32xf32>
    %117 = arith.mulf %114, %98 : vector<8x32xf32>
    %118 = arith.mulf %113, %115 : vector<8x32xf32>
    %119 = arith.addf %117, %118 : vector<8x32xf32>
    %120 = math.tanh %119 : vector<8x32xf32>
    %121 = arith.mulf %116, %120 : vector<8x32xf32>
    %c5_i32 = arith.constant 5 : i32
    %122 = arith.index_cast %c5_i32 : i32 to index
    %c0_38 = arith.constant 0 : index
    %c0_39 = arith.constant 0 : index
    %123 = vector.load %arg13[%122, %c0_38, %c0_39] : memref<8x8x128xf32, #tpu.memory_space<vmem>>, vector<1x8x128xf32>
    %124 = vector.shape_cast %123 : vector<1x8x128xf32> to vector<8x128xf32>
    %125 = arith.truncf %121 : vector<8x32xf32> to vector<8x32xbf16>
    %cst_40 = arith.constant dense<0.000000e+00> : vector<8x128xf32>
    %126 = tpu.matmul %125, %14, %cst_40 {dimension_numbers = #tpu.dot_dimension_numbers<[1], [0], [0], [1], [0, 0, 1, 1], [], []>} : vector<8x32xbf16>, vector<32x128xbf16>, vector<8x128xf32> -> vector<8x128xf32>
    %127 = arith.addf %124, %126 : vector<8x128xf32>
    %128 = arith.negf %127 : vector<8x128xf32>
    %129 = math.exp %128 : vector<8x128xf32>
    %cst_41 = arith.constant 1.000000e+00 : f32
    %130 = vector.broadcast %cst_41 : f32 to vector<8x128xf32>
    %131 = arith.addf %130, %129 : vector<8x128xf32>
    %132 = arith.divf %130, %131 : vector<8x128xf32>
    %133 = math.tanh %127 : vector<8x128xf32>
    %134 = vector.extract_strided_slice %132 {offsets = [0, 0], sizes = [8, 32], strides = [1, 1]} : vector<8x128xf32> to vector<8x32xf32>
    %135 = vector.extract_strided_slice %132 {offsets = [0, 32], sizes = [8, 32], strides = [1, 1]} : vector<8x128xf32> to vector<8x32xf32>
    %136 = vector.extract_strided_slice %133 {offsets = [0, 64], sizes = [8, 32], strides = [1, 1]} : vector<8x128xf32> to vector<8x32xf32>
    %137 = vector.extract_strided_slice %132 {offsets = [0, 96], sizes = [8, 32], strides = [1, 1]} : vector<8x128xf32> to vector<8x32xf32>
    %138 = arith.mulf %135, %119 : vector<8x32xf32>
    %139 = arith.mulf %134, %136 : vector<8x32xf32>
    %140 = arith.addf %138, %139 : vector<8x32xf32>
    %141 = math.tanh %140 : vector<8x32xf32>
    %142 = arith.mulf %137, %141 : vector<8x32xf32>
    %c6_i32 = arith.constant 6 : i32
    %143 = arith.index_cast %c6_i32 : i32 to index
    %c0_42 = arith.constant 0 : index
    %c0_43 = arith.constant 0 : index
    %144 = vector.load %arg13[%143, %c0_42, %c0_43] : memref<8x8x128xf32, #tpu.memory_space<vmem>>, vector<1x8x128xf32>
    %145 = vector.shape_cast %144 : vector<1x8x128xf32> to vector<8x128xf32>
    %146 = arith.truncf %142 : vector<8x32xf32> to vector<8x32xbf16>
    %cst_44 = arith.constant dense<0.000000e+00> : vector<8x128xf32>
    %147 = tpu.matmul %146, %14, %cst_44 {dimension_numbers = #tpu.dot_dimension_numbers<[1], [0], [0], [1], [0, 0, 1, 1], [], []>} : vector<8x32xbf16>, vector<32x128xbf16>, vector<8x128xf32> -> vector<8x128xf32>
    %148 = arith.addf %145, %147 : vector<8x128xf32>
    %149 = arith.negf %148 : vector<8x128xf32>
    %150 = math.exp %149 : vector<8x128xf32>
    %cst_45 = arith.constant 1.000000e+00 : f32
    %151 = vector.broadcast %cst_45 : f32 to vector<8x128xf32>
    %152 = arith.addf %151, %150 : vector<8x128xf32>
    %153 = arith.divf %151, %152 : vector<8x128xf32>
    %154 = math.tanh %148 : vector<8x128xf32>
    %155 = vector.extract_strided_slice %153 {offsets = [0, 0], sizes = [8, 32], strides = [1, 1]} : vector<8x128xf32> to vector<8x32xf32>
    %156 = vector.extract_strided_slice %153 {offsets = [0, 32], sizes = [8, 32], strides = [1, 1]} : vector<8x128xf32> to vector<8x32xf32>
    %157 = vector.extract_strided_slice %154 {offsets = [0, 64], sizes = [8, 32], strides = [1, 1]} : vector<8x128xf32> to vector<8x32xf32>
    %158 = vector.extract_strided_slice %153 {offsets = [0, 96], sizes = [8, 32], strides = [1, 1]} : vector<8x128xf32> to vector<8x32xf32>
    %159 = arith.mulf %156, %140 : vector<8x32xf32>
    %160 = arith.mulf %155, %157 : vector<8x32xf32>
    %161 = arith.addf %159, %160 : vector<8x32xf32>
    %162 = math.tanh %161 : vector<8x32xf32>
    %163 = arith.mulf %158, %162 : vector<8x32xf32>
    %c7_i32 = arith.constant 7 : i32
    %164 = arith.index_cast %c7_i32 : i32 to index
    %c0_46 = arith.constant 0 : index
    %c0_47 = arith.constant 0 : index
    %165 = vector.load %arg13[%164, %c0_46, %c0_47] : memref<8x8x128xf32, #tpu.memory_space<vmem>>, vector<1x8x128xf32>
    %166 = vector.shape_cast %165 : vector<1x8x128xf32> to vector<8x128xf32>
    %167 = arith.truncf %163 : vector<8x32xf32> to vector<8x32xbf16>
    %cst_48 = arith.constant dense<0.000000e+00> : vector<8x128xf32>
    %168 = tpu.matmul %167, %14, %cst_48 {dimension_numbers = #tpu.dot_dimension_numbers<[1], [0], [0], [1], [0, 0, 1, 1], [], []>} : vector<8x32xbf16>, vector<32x128xbf16>, vector<8x128xf32> -> vector<8x128xf32>
    %169 = arith.addf %166, %168 : vector<8x128xf32>
    %170 = arith.negf %169 : vector<8x128xf32>
    %171 = math.exp %170 : vector<8x128xf32>
    %cst_49 = arith.constant 1.000000e+00 : f32
    %172 = vector.broadcast %cst_49 : f32 to vector<8x128xf32>
    %173 = arith.addf %172, %171 : vector<8x128xf32>
    %174 = arith.divf %172, %173 : vector<8x128xf32>
    %175 = math.tanh %169 : vector<8x128xf32>
    %176 = vector.extract_strided_slice %174 {offsets = [0, 0], sizes = [8, 32], strides = [1, 1]} : vector<8x128xf32> to vector<8x32xf32>
    %177 = vector.extract_strided_slice %174 {offsets = [0, 32], sizes = [8, 32], strides = [1, 1]} : vector<8x128xf32> to vector<8x32xf32>
    %178 = vector.extract_strided_slice %175 {offsets = [0, 64], sizes = [8, 32], strides = [1, 1]} : vector<8x128xf32> to vector<8x32xf32>
    %179 = vector.extract_strided_slice %174 {offsets = [0, 96], sizes = [8, 32], strides = [1, 1]} : vector<8x128xf32> to vector<8x32xf32>
    %180 = arith.mulf %177, %161 : vector<8x32xf32>
    %181 = arith.mulf %176, %178 : vector<8x32xf32>
    %182 = arith.addf %180, %181 : vector<8x32xf32>
    %183 = math.tanh %182 : vector<8x32xf32>
    %184 = arith.mulf %179, %183 : vector<8x32xf32>
    %c8_i32 = arith.constant 8 : i32
    %c0_50 = arith.constant 0 : index
    %c0_51 = arith.constant 0 : index
    %185 = vector.load %arg11[%c0_50, %c0_51] : memref<8x32xf32, #tpu.memory_space<vmem>>, vector<8x32xf32>
    tpu.vector_store %arg11[%c0_50, %c0_51], %184 {strides = array<i32>} : memref<8x32xf32, #tpu.memory_space<vmem>>, vector<8x32xf32>,
    %c0_52 = arith.constant 0 : index
    %c0_53 = arith.constant 0 : index
    %186 = vector.load %arg12[%c0_52, %c0_53] : memref<8x32xf32, #tpu.memory_space<vmem>>, vector<8x32xf32>
    tpu.vector_store %arg12[%c0_52, %c0_53], %182 {strides = array<i32>} : memref<8x32xf32, #tpu.memory_space<vmem>>, vector<8x32xf32>,
    %c0_i32_54 = arith.constant 0 : i32
    %187 = arith.cmpi eq, %arg1, %c0_i32_54 : i32
    %188 = arith.extui %187 : i1 to i32
    %c0_i32_55 = arith.constant 0 : i32
    %189 = arith.cmpi ne, %188, %c0_i32_55 : i32
    scf.if %189 {
      %c0_56 = arith.constant 0 : index
      %c0_57 = arith.constant 0 : index
      %190 = vector.load %arg11[%c0_56, %c0_57] : memref<8x32xf32, #tpu.memory_space<vmem>>, vector<8x32xf32>
      %c0_58 = arith.constant 0 : index
      %c0_59 = arith.constant 0 : index
      %191 = vector.load %arg6[%c0_58, %c0_59] : memref<32x32xf32, #tpu.memory_space<vmem>>, vector<32x32xf32>
      %cst_60 = arith.constant dense<0.000000e+00> : vector<8x32xf32>
      %192 = tpu.matmul %190, %191, %cst_60 {dimension_numbers = #tpu.dot_dimension_numbers<[1], [0], [0], [1], [0, 0, 1, 1], [], []>} : vector<8x32xf32>, vector<32x32xf32>, vector<8x32xf32> -> vector<8x32xf32>
      %c0_61 = arith.constant 0 : index
      %c0_62 = arith.constant 0 : index
      %193 = vector.load %arg7[%c0_61, %c0_62] : memref<1x32xf32, #tpu.memory_space<vmem>>, vector<1x32xf32>
      %194 = vector.broadcast %193 : vector<1x32xf32> to vector<8x32xf32>
      %195 = arith.addf %192, %194 : vector<8x32xf32>
      %cst_63 = arith.constant 0.000000e+00 : f32
      %196 = vector.broadcast %cst_63 : f32 to vector<8x32xf32>
      %197 = arith.maximumf %195, %196 : vector<8x32xf32>
      %c0_64 = arith.constant 0 : index
      %c0_65 = arith.constant 0 : index
      %198 = vector.load %arg8[%c0_64, %c0_65] : memref<32x1xf32, #tpu.memory_space<vmem>>, vector<32x1xf32>
      %cst_66 = arith.constant dense<0.000000e+00> : vector<8x1xf32>
      %199 = tpu.matmul %197, %198, %cst_66 {dimension_numbers = #tpu.dot_dimension_numbers<[1], [0], [0], [1], [0, 0, 1, 1], [], []>} : vector<8x32xf32>, vector<32x1xf32>, vector<8x1xf32> -> vector<8x1xf32>
      %c0_67 = arith.constant 0 : index
      %c0_68 = arith.constant 0 : index
      %200 = vector.load %arg9[%c0_67, %c0_68] : memref<1x1xf32, #tpu.memory_space<vmem>>, vector<1x1xf32>
      %201 = vector.broadcast %200 : vector<1x1xf32> to vector<8x1xf32>
      %202 = arith.addf %199, %201 : vector<8x1xf32>
      %203 = arith.negf %202 : vector<8x1xf32>
      %204 = math.exp %203 : vector<8x1xf32>
      %cst_69 = arith.constant 1.000000e+00 : f32
      %205 = vector.broadcast %cst_69 : f32 to vector<8x1xf32>
      %206 = arith.addf %205, %204 : vector<8x1xf32>
      %207 = arith.divf %205, %206 : vector<8x1xf32>
      %c0_70 = arith.constant 0 : index
      %c0_71 = arith.constant 0 : index
      %208 = vector.load %arg10[%c0_70, %c0_71] : memref<8x1xf32, #tpu.memory_space<vmem>>, vector<8x1xf32>
      tpu.vector_store %arg10[%c0_70, %c0_71], %207 {strides = array<i32>} : memref<8x1xf32, #tpu.memory_space<vmem>>, vector<8x1xf32>,
    } else {
    }
    return
  }
  func.func @transform_0(%arg0: i32, %arg1: i32) -> (i32, i32, i32) {
    %c0_i32 = arith.constant 0 : i32
    %c0_i32_0 = arith.constant 0 : i32
    return %arg0, %arg1, %c0_i32 : i32, i32, i32
  }
  func.func @transform_1(%arg0: i32, %arg1: i32) -> (i32, i32, i32) {
    %c0_i32 = arith.constant 0 : i32
    %c0_i32_0 = arith.constant 0 : i32
    %c0_i32_1 = arith.constant 0 : i32
    %c0_i32_2 = arith.constant 0 : i32
    return %c0_i32, %c0_i32_0, %c0_i32_1 : i32, i32, i32
  }
  func.func @transform_2(%arg0: i32, %arg1: i32) -> (i32, i32, i32) {
    %c0_i32 = arith.constant 0 : i32
    %c0_i32_0 = arith.constant 0 : i32
    %c0_i32_1 = arith.constant 0 : i32
    %c0_i32_2 = arith.constant 0 : i32
    return %c0_i32, %c0_i32_0, %c0_i32_1 : i32, i32, i32
  }
  func.func @transform_3(%arg0: i32, %arg1: i32) -> (i32, i32) {
    %c0_i32 = arith.constant 0 : i32
    %c0_i32_0 = arith.constant 0 : i32
    %c0_i32_1 = arith.constant 0 : i32
    return %c0_i32, %c0_i32_0 : i32, i32
  }
  func.func @transform_4(%arg0: i32, %arg1: i32) -> (i32, i32) {
    %c0_i32 = arith.constant 0 : i32
    %c0_i32_0 = arith.constant 0 : i32
    %c0_i32_1 = arith.constant 0 : i32
    return %c0_i32, %c0_i32_0 : i32, i32
  }
  func.func @transform_5(%arg0: i32, %arg1: i32) -> (i32, i32) {
    %c0_i32 = arith.constant 0 : i32
    %c0_i32_0 = arith.constant 0 : i32
    %c0_i32_1 = arith.constant 0 : i32
    return %c0_i32, %c0_i32_0 : i32, i32
  }
  func.func @transform_6(%arg0: i32, %arg1: i32) -> (i32, i32) {
    %c0_i32 = arith.constant 0 : i32
    %c0_i32_0 = arith.constant 0 : i32
    %c0_i32_1 = arith.constant 0 : i32
    return %c0_i32, %c0_i32_0 : i32, i32
  }
  func.func @transform_7(%arg0: i32, %arg1: i32) -> (i32, i32) {
    %c0_i32 = arith.constant 0 : i32
    %c0_i32_0 = arith.constant 0 : i32
    %c0_i32_1 = arith.constant 0 : i32
    return %c0_i32, %c0_i32_0 : i32, i32
  }
  func.func @transform_8(%arg0: i32, %arg1: i32) -> (i32, i32) {
    %c0_i32 = arith.constant 0 : i32
    %c0_i32_0 = arith.constant 0 : i32
    return %arg0, %c0_i32 : i32, i32
  }
}

</mosaic_0001>

<llo_original>
// kernel: tpu_custom_call.1
$region0: #{tpu_custom_call.1}
  #allocation0 [shape = 'u32[]', space=smem, size = 0x4, offset = 0x4, fixed_abs, tag = 'smem constant byte address 0x4 - core index']
  #allocation1 [shape = 'u32[144,128]{1,0:T(1,128)}', space=vmem, size = 0x12000, scoped, tag = 'internal scratch']
  #allocation2 [shape = 'f32[8,32]{1,0:T(8,128)}', space=vmem, size = 0x1000, scoped, tag = 'scratch operand']
  #allocation3 [shape = 'f32[8,32]{1,0:T(8,128)}', space=vmem, size = 0x1000, scoped, tag = 'scratch operand']
  #allocation4 [shape = 'f32[8,8,128]{2,1,0:T(8,128)}', space=vmem, size = 0x8000, scoped, tag = 'scratch operand']
  #allocation5 [shape = 'f32[1,1]{1,0:T(1,128)S(1)}', space=vmem, size = 0x200, scoped, tag = 'scoped memory for tpu_custom_call.1']
  %s0 = inlined_call_operand.hbm [shape: f32[1,8,8], index: 0, kind: input, shape index: {}]
  %s1 = inlined_call_operand.vmem [shape: f32[1,1,128], index: 1, kind: input, shape index: {}]
  %s2 = inlined_call_operand.vmem [shape: f32[1,1,128], index: 2, kind: input, shape index: {}]
  %s3 = inlined_call_operand.vmem [shape: bf16[32,128], index: 3, kind: input, shape index: {}]
  %s4 = inlined_call_operand.vmem [shape: f32[32,32], index: 4, kind: input, shape index: {}]
  %s5 = inlined_call_operand.vmem [shape: f32[1,32], index: 5, kind: input, shape index: {}]
  %s6 = inlined_call_operand.vmem [shape: f32[32,1], index: 6, kind: input, shape index: {}]
  %s7 = inlined_call_operand.<no memory space> [shape: f32[1,1], index: 7, kind: input, shape index: {}]
  %s8 = inlined_call_operand.vmem [shape: f32[8,1], index: 8, kind: output, shape index: {}]
  %s9 = sld [smem:[#allocation0]]
  $region54: #{tpu_custom_call.1} parent=0
    _
  %s11 = ssub.s32 1, %s9
  %s12 = scalar_select 0, %s11, %s9
  %v13 = vstv %s7
  %14 = vst [vmem:[#allocation5] sm:$0x1] %v13
  $region1: #{tpu_custom_call.1} parent=0
    #allocation6 [shape = 'u8[4096]{0}', space=vmem, size = 0x1000, scoped, tag = 'input window, operand 0, single buffered']
    #allocation7 [shape = 's32[1]{0}', space=sflag, size = 0x4, scoped, tag = 'scoped memory for tpu_custom_call.1']
    %15 = vsyncpa [#allocation7], 0
    // Predicated region
    $region2: #{tpu_custom_call.1} parent=1 // pred_check
      _
    $region3: #{tpu_custom_call.1} parent=1 // pred_check_branch
      %17 = sbr.rel (0) target = $region5
    $region4: #{tpu_custom_call.1} parent=1 // pred_region
      %s19 = ssub.s32 128, 128
      %20 = vsyncadd [#allocation7], %s19
      %s22 = sshll.u32 [#allocation6], 4
      %s23 = int_to_ptr.vmem [resolvable:$true] %s22
      %25 = dma.hbm_to_vmem [thread:$0]  %s0, 128, %s23, [#allocation7]
    $region5: #{tpu_custom_call.1} parent=1 // pred_fallthru
      _
    // Predicated region
    $region6: #{tpu_custom_call.1} parent=1 // pred_check
      _
    $region7: #{tpu_custom_call.1} parent=1 // pred_check_branch
      %27 = sbr.rel (0) target = $region9
    $region8: #{tpu_custom_call.1} parent=1 // pred_region
      _
    $region9: #{tpu_custom_call.1} parent=1 // pred_fallthru
      _
    // Predicated region
    $region10: #{tpu_custom_call.1} parent=1 // pred_check
      _
    $region11: #{tpu_custom_call.1} parent=1 // pred_check_branch
      %29 = sbr.rel (0) target = $region13
    $region12: #{tpu_custom_call.1} parent=1 // pred_region
      _
    $region13: #{tpu_custom_call.1} parent=1 // pred_fallthru
      _
    // Predicated region
    $region14: #{tpu_custom_call.1} parent=1 // pred_check
      _
    $region15: #{tpu_custom_call.1} parent=1 // pred_check_branch
      %31 = sbr.rel (0) target = $region17
    $region16: #{tpu_custom_call.1} parent=1 // pred_region
      _
    $region17: #{tpu_custom_call.1} parent=1 // pred_fallthru
      _
    // Predicated region
    $region18: #{tpu_custom_call.1} parent=1 // pred_check
      _
    $region19: #{tpu_custom_call.1} parent=1 // pred_check_branch
      %33 = sbr.rel (0) target = $region21
    $region20: #{tpu_custom_call.1} parent=1 // pred_region
      _
    $region21: #{tpu_custom_call.1} parent=1 // pred_fallthru
      _
    // Predicated region
    $region22: #{tpu_custom_call.1} parent=1 // pred_check
      _
    $region23: #{tpu_custom_call.1} parent=1 // pred_check_branch
      %35 = sbr.rel (0) target = $region25
    $region24: #{tpu_custom_call.1} parent=1 // pred_region
      _
    $region25: #{tpu_custom_call.1} parent=1 // pred_fallthru
      _
    // Predicated region
    $region26: #{tpu_custom_call.1} parent=1 // pred_check
      _
    $region27: #{tpu_custom_call.1} parent=1 // pred_check_branch
      %37 = sbr.rel (0) target = $region29
    $region28: #{tpu_custom_call.1} parent=1 // pred_region
      _
    $region29: #{tpu_custom_call.1} parent=1 // pred_fallthru
      _
    // Predicated region
    $region30: #{tpu_custom_call.1} parent=1 // pred_check
      _
    $region31: #{tpu_custom_call.1} parent=1 // pred_check_branch
      %39 = sbr.rel (0) target = $region33
    $region32: #{tpu_custom_call.1} parent=1 // pred_region
      _
    $region33: #{tpu_custom_call.1} parent=1 // pred_fallthru
      _
    // Predicated region
    $region34: #{tpu_custom_call.1} parent=1 // pred_check
      _
    $region35: #{tpu_custom_call.1} parent=1 // pred_check_branch
      %41 = sbr.rel (0) target = $region37
    $region36: #{tpu_custom_call.1} parent=1 // pred_region
      %42 = dma.done [#allocation7], 128
    $region37: #{tpu_custom_call.1} parent=1 // pred_fallthru
      _
    %p44 = scmp.eq.s32.totalorder 0, 0
    // Predicated region
    $region38: #{tpu_custom_call.1} parent=1 // pred_check
      %p45 = pneg %p44
    $region39: #{tpu_custom_call.1} parent=1 // pred_check_branch
      %47 = sbr.rel (%p45) target = $region41
    $region40: #{tpu_custom_call.1} parent=1 // pred_region
      %vm48 = vcmask 261120
      %49 = vst.msk [vmem:[#allocation2] sm:$0xff] %vm48, 0.0
      %50 = vst.msk [vmem:[#allocation3] sm:$0xff] %vm48, 0.0
      %vm51 = vcmask 7168
      %52 = vst.msk [vmem:[%s8] sm:$0xff] %vm51, 0.0
    $region41: #{tpu_custom_call.1} parent=1 // pred_fallthru
      _
    %v53 = vld [vmem:[#allocation6] sm:$0xff]
    %v54 = vlaneseq
    %v55 = vshrl.u32 %v54, 7
    %v56 = vsub.s32 0, %v55
    %v57 = vrot.slane %v53, %v56
    %59 = vbcast.lane.b32.xlu0 %v57, 256
    %v60 = vpop.permute.xlu0 %59
    %v61 = vlaneseq
    %v62 = vshrl.u32 %v61, 7
    %v63 = vsub.s32 1, %v62
    %v64 = vrot.slane %v53, %v63
    %66 = vbcast.lane.b32.xlu0 %v64, 256
    %v67 = vpop.permute.xlu0 %66
    %v68 = vlaneseq
    %v69 = vshrl.u32 %v68, 7
    %v70 = vsub.s32 2, %v69
    %v71 = vrot.slane %v53, %v70
    %73 = vbcast.lane.b32.xlu0 %v71, 256
    %v74 = vpop.permute.xlu0 %73
    %v75 = vlaneseq
    %v76 = vshrl.u32 %v75, 7
    %v77 = vsub.s32 3, %v76
    %v78 = vrot.slane %v53, %v77
    %80 = vbcast.lane.b32.xlu0 %v78, 256
    %v81 = vpop.permute.xlu0 %80
    %v82 = vlaneseq
    %v83 = vshrl.u32 %v82, 7
    %v84 = vsub.s32 4, %v83
    %v85 = vrot.slane %v53, %v84
    %87 = vbcast.lane.b32.xlu0 %v85, 256
    %v88 = vpop.permute.xlu0 %87
    %v89 = vlaneseq
    %v90 = vshrl.u32 %v89, 7
    %v91 = vsub.s32 5, %v90
    %v92 = vrot.slane %v53, %v91
    %94 = vbcast.lane.b32.xlu0 %v92, 256
    %v95 = vpop.permute.xlu0 %94
    %v96 = vlaneseq
    %v97 = vshrl.u32 %v96, 7
    %v98 = vsub.s32 6, %v97
    %v99 = vrot.slane %v53, %v98
    %101 = vbcast.lane.b32.xlu0 %v99, 256
    %v102 = vpop.permute.xlu0 %101
    %v103 = vlaneseq
    %v104 = vshrl.u32 %v103, 7
    %v105 = vsub.s32 7, %v104
    %v106 = vrot.slane %v53, %v105
    %108 = vbcast.lane.b32.xlu0 %v106, 256
    %v109 = vpop.permute.xlu0 %108
    %v110 = vld [vmem:[%s1] sm:$0x1]
    %v112 = vlaneseq
    %v113 = vshrl.u32 %v112, 7
    %v114 = vsub.s32 0, %v113
    %v115 = vrot.slane %v110, %v114
    %v117 = vmul.f32 %v60, %v115
    %v118 = vmul.f32 %v67, %v115
    %v119 = vmul.f32 %v74, %v115
    %v120 = vmul.f32 %v81, %v115
    %v121 = vmul.f32 %v88, %v115
    %v122 = vmul.f32 %v95, %v115
    %v123 = vmul.f32 %v102, %v115
    %v124 = vmul.f32 %v109, %v115
    %v125 = vld [vmem:[%s2] sm:$0x1]
    %v127 = vlaneseq
    %v128 = vshrl.u32 %v127, 7
    %v129 = vsub.s32 0, %v128
    %v130 = vrot.slane %v125, %v129
    %v132 = vadd.f32 %v117, %v130
    %v133 = vadd.f32 %v118, %v130
    %v134 = vadd.f32 %v119, %v130
    %v135 = vadd.f32 %v120, %v130
    %v136 = vadd.f32 %v121, %v130
    %v137 = vadd.f32 %v122, %v130
    %v138 = vadd.f32 %v123, %v130
    %v139 = vadd.f32 %v124, %v130
    %140 = vst [vmem:[#allocation4] sm:$0xff] %v132
    %141 = vst [vmem:[#allocation4 + $0x8] sm:$0xff] %v133
    %142 = vst [vmem:[#allocation4 + $0x10] sm:$0xff] %v134
    %143 = vst [vmem:[#allocation4 + $0x18] sm:$0xff] %v135
    %144 = vst [vmem:[#allocation4 + $0x20] sm:$0xff] %v136
    %145 = vst [vmem:[#allocation4 + $0x28] sm:$0xff] %v137
    %146 = vst [vmem:[#allocation4 + $0x30] sm:$0xff] %v138
    %147 = vst [vmem:[#allocation4 + $0x38] sm:$0xff] %v139
    %v148 = vld [vmem:[%s3] sm:$0xf]
    %v149 = vld [vmem:[%s3 + $0x4] sm:$0xf]
    %v150 = vld [vmem:[%s3 + $0x8] sm:$0xf]
    %v151 = vld [vmem:[%s3 + $0xc] sm:$0xf]
    %v152 = vld [vmem:[#allocation2] sm:$0xff]
    %v153 = vld [vmem:[#allocation3] sm:$0xff]
    %v154 = vld [vmem:[#allocation4] sm:$0xff]
    %v155 = vpack.c.bf16 %v152, %v152
    %v160 = vunpack.c.l.b16 %v148
    %v161 = vunpack.c.l.b16 %v149
    %v162 = vunpack.c.l.b16 %v150
    %v163 = vunpack.c.l.b16 %v151
    %v164 = vpack.c.b16 %v161, %v160
    %v165 = vpack.c.b16 %v163, %v162
    %vm168 = vcmask 261120
    %v170 = vsel %vm168, %v155, 0
    %172 = vmatprep.subr.bf16.mxu0 0
    %173 = vmatpush1.bf16.msra.mxu0 %v164
    %174 = vmatprep.subr.bf16.mxu0 0
    %175 = vmatpush1.bf16.msra.mxu0 %v165
    %176 = vmatprep.subr.bf16.mxu0 0
    %177 = vmatpush1.bf16.msra.mxu0 0
    %178 = vmatprep.subr.bf16.mxu0 0
    %179 = vmatpush1.bf16.msra.mxu0 0
    %180 = vmatprep.subr.bf16.mxu0 0
    %181 = vmatpush1.bf16.msra.mxu0 0
    %182 = vmatprep.subr.bf16.mxu0 0
    %183 = vmatpush1.bf16.msra.mxu0 0
    %184 = vmatprep.subr.bf16.mxu0 0
    %185 = vmatpush1.bf16.msra.mxu0 0
    %186 = vmatprep.subr.bf16.mxu0 0
    %187 = vmatpush1.bf16.msra.mxu0 0
    %188 = vmatprep.subr.bf16.mxu0 0
    %189 = vmatpush1.bf16.msra.mxu0 0
    %190 = vmatprep.subr.bf16.mxu0 0
    %191 = vmatpush1.bf16.msra.mxu0 0
    %192 = vmatprep.subr.bf16.mxu0 0
    %193 = vmatpush1.bf16.msra.mxu0 0
    %194 = vmatprep.subr.bf16.mxu0 0
    %195 = vmatpush1.bf16.msra.mxu0 0
    %196 = vmatprep.subr.bf16.mxu0 0
    %197 = vmatpush1.bf16.msra.mxu0 0
    %198 = vmatprep.subr.bf16.mxu0 0
    %199 = vmatpush1.bf16.msra.mxu0 0
    %200 = vmatprep.subr.bf16.mxu0 0
    %201 = vmatpush1.bf16.msra.mxu0 0
    %202 = vmatprep.subr.bf16.mxu0 0
    %203 = vmatpush1.bf16.msra.mxu0 0
    %204 = vmatprep.mubr.bf16.mxu0 0
    %205 = vmatmul.mubr.bf16.gmra.mrb[0].mxu0 %v170
    %v206 = vpop.f32.mrb[0].mxu0
    %v207 = vadd.f32 0.0, %v206
    %v208 = vpop.f32.mrb[0].mxu0
    %v209 = vpop.f32.mrb[0].mxu0
    %v210 = vpop.f32.mrb[0].mxu0
    %211 = vdwg.mxu0
    %v212 = vadd.f32 %v154, %v207
    %v213 = vxor.u32 %v212, 2147483648
    %v214 = vmul.f32 %v213, 1.442695
    %v215 = vpow.pop %v214
    %v216 = vadd.f32 %v215, 1.0
    %v217 = vrcp.pop %v216
    %v218 = vmul.f32 1.0, %v217
    %v219 = vtanh.pop %v212
    %221 = vrot.lane.b32.xlu0 %v153, 32
    %v222 = vpop.permute.xlu0 %221
    %v224 = vmul.f32 %v218, %v222
    %226 = vrot.lane.b32.xlu0 %v219, 64
    %v227 = vpop.permute.xlu0 %226
    %v229 = vmul.f32 %v218, %v227
    %231 = vrot.lane.b32.xlu0 %v229, 32
    %v232 = vpop.permute.xlu0 %231
    %v234 = vadd.f32 %v224, %v232
    %v235 = vtanh.pop %v234
    %237 = vrot.lane.b32.xlu0 %v235, 64
    %v238 = vpop.permute.xlu0 %237
    %v240 = vmul.f32 %v218, %v238
    %s241 = scalar_lea.vmem [#allocation4], 8
    %v242 = vld [vmem:[%s241] sm:$0xff]
    %v243 = vpack.c.bf16 %v240, %v240
    %245 = vrot.lane.b32.xlu0 %v243, 32
    %v246 = vpop.permute.xlu0 %245
    %v248 = vsel %vm168, %v246, 0
    %250 = vmatprep.subr.bf16.mxu0 0
    %251 = vmatpush1.bf16.msra.mxu0 %v164
    %252 = vmatprep.subr.bf16.mxu0 0
    %253 = vmatpush1.bf16.msra.mxu0 %v165
    %254 = vmatprep.subr.bf16.mxu0 0
    %255 = vmatpush1.bf16.msra.mxu0 0
    %256 = vmatprep.subr.bf16.mxu0 0
    %257 = vmatpush1.bf16.msra.mxu0 0
    %258 = vmatprep.subr.bf16.mxu0 0
    %259 = vmatpush1.bf16.msra.mxu0 0
    %260 = vmatprep.subr.bf16.mxu0 0
    %261 = vmatpush1.bf16.msra.mxu0 0
    %262 = vmatprep.subr.bf16.mxu0 0
    %263 = vmatpush1.bf16.msra.mxu0 0
    %264 = vmatprep.subr.bf16.mxu0 0
    %265 = vmatpush1.bf16.msra.mxu0 0
    %266 = vmatprep.subr.bf16.mxu0 0
    %267 = vmatpush1.bf16.msra.mxu0 0
    %268 = vmatprep.subr.bf16.mxu0 0
    %269 = vmatpush1.bf16.msra.mxu0 0
    %270 = vmatprep.subr.bf16.mxu0 0
    %271 = vmatpush1.bf16.msra.mxu0 0
    %272 = vmatprep.subr.bf16.mxu0 0
    %273 = vmatpush1.bf16.msra.mxu0 0
    %274 = vmatprep.subr.bf16.mxu0 0
    %275 = vmatpush1.bf16.msra.mxu0 0
    %276 = vmatprep.subr.bf16.mxu0 0
    %277 = vmatpush1.bf16.msra.mxu0 0
    %278 = vmatprep.subr.bf16.mxu0 0
    %279 = vmatpush1.bf16.msra.mxu0 0
    %280 = vmatprep.subr.bf16.mxu0 0
    %281 = vmatpush1.bf16.msra.mxu0 0
    %282 = vmatprep.mubr.bf16.mxu0 0
    %283 = vmatmul.mubr.bf16.gmra.mrb[0].mxu0 %v248
    %v284 = vpop.f32.mrb[0].mxu0
    %v285 = vadd.f32 0.0, %v284
    %v286 = vpop.f32.mrb[0].mxu0
    %v287 = vpop.f32.mrb[0].mxu0
    %v288 = vpop.f32.mrb[0].mxu0
    %289 = vdwg.mxu0
    %v290 = vadd.f32 %v242, %v285
    %v291 = vxor.u32 %v290, 2147483648
    %v292 = vmul.f32 %v291, 1.442695
    %v293 = vpow.pop %v292
    %v294 = vadd.f32 %v293, 1.0
    %v295 = vrcp.pop %v294
    %v296 = vmul.f32 1.0, %v295
    %v297 = vtanh.pop %v290
    %v298 = vmul.f32 %v296, %v234
    %300 = vrot.lane.b32.xlu0 %v297, 64
    %v301 = vpop.permute.xlu0 %300
    %v303 = vmul.f32 %v296, %v301
    %305 = vrot.lane.b32.xlu0 %v303, 32
    %v306 = vpop.permute.xlu0 %305
    %v308 = vadd.f32 %v298, %v306
    %v309 = vtanh.pop %v308
    %311 = vrot.lane.b32.xlu0 %v309, 64
    %v312 = vpop.permute.xlu0 %311
    %v314 = vmul.f32 %v296, %v312
    %s315 = scalar_lea.vmem [#allocation4], 16
    %v316 = vld [vmem:[%s315] sm:$0xff]
    %v317 = vpack.c.bf16 %v314, %v314
    %319 = vrot.lane.b32.xlu0 %v317, 32
    %v320 = vpop.permute.xlu0 %319
    %v322 = vsel %vm168, %v320, 0
    %324 = vmatprep.subr.bf16.mxu0 0
    %325 = vmatpush1.bf16.msra.mxu0 %v164
    %326 = vmatprep.subr.bf16.mxu0 0
    %327 = vmatpush1.bf16.msra.mxu0 %v165
    %328 = vmatprep.subr.bf16.mxu0 0
    %329 = vmatpush1.bf16.msra.mxu0 0
    %330 = vmatprep.subr.bf16.mxu0 0
    %331 = vmatpush1.bf16.msra.mxu0 0
    %332 = vmatprep.subr.bf16.mxu0 0
    %333 = vmatpush1.bf16.msra.mxu0 0
    %334 = vmatprep.subr.bf16.mxu0 0
    %335 = vmatpush1.bf16.msra.mxu0 0
    %336 = vmatprep.subr.bf16.mxu0 0
    %337 = vmatpush1.bf16.msra.mxu0 0
    %338 = vmatprep.subr.bf16.mxu0 0
    %339 = vmatpush1.bf16.msra.mxu0 0
    %340 = vmatprep.subr.bf16.mxu0 0
    %341 = vmatpush1.bf16.msra.mxu0 0
    %342 = vmatprep.subr.bf16.mxu0 0
    %343 = vmatpush1.bf16.msra.mxu0 0
    %344 = vmatprep.subr.bf16.mxu0 0
    %345 = vmatpush1.bf16.msra.mxu0 0
    %346 = vmatprep.subr.bf16.mxu0 0
    %347 = vmatpush1.bf16.msra.mxu0 0
    %348 = vmatprep.subr.bf16.mxu0 0
    %349 = vmatpush1.bf16.msra.mxu0 0
    %350 = vmatprep.subr.bf16.mxu0 0
    %351 = vmatpush1.bf16.msra.mxu0 0
    %352 = vmatprep.subr.bf16.mxu0 0
    %353 = vmatpush1.bf16.msra.mxu0 0
    %354 = vmatprep.subr.bf16.mxu0 0
    %355 = vmatpush1.bf16.msra.mxu0 0
    %356 = vmatprep.mubr.bf16.mxu0 0
    %357 = vmatmul.mubr.bf16.gmra.mrb[0].mxu0 %v322
    %v358 = vpop.f32.mrb[0].mxu0
    %v359 = vadd.f32 0.0, %v358
    %v360 = vpop.f32.mrb[0].mxu0
    %v361 = vpop.f32.mrb[0].mxu0
    %v362 = vpop.f32.mrb[0].mxu0
    %363 = vdwg.mxu0
    %v364 = vadd.f32 %v316, %v359
    %v365 = vxor.u32 %v364, 2147483648
    %v366 = vmul.f32 %v365, 1.442695
    %v367 = vpow.pop %v366
    %v368 = vadd.f32 %v367, 1.0
    %v369 = vrcp.pop %v368
    %v370 = vmul.f32 1.0, %v369
    %v371 = vtanh.pop %v364
    %v372 = vmul.f32 %v370, %v308
    %374 = vrot.lane.b32.xlu0 %v371, 64
    %v375 = vpop.permute.xlu0 %374
    %v377 = vmul.f32 %v370, %v375
    %379 = vrot.lane.b32.xlu0 %v377, 32
    %v380 = vpop.permute.xlu0 %379
    %v382 = vadd.f32 %v372, %v380
    %v383 = vtanh.pop %v382
    %385 = vrot.lane.b32.xlu0 %v383, 64
    %v386 = vpop.permute.xlu0 %385
    %v388 = vmul.f32 %v370, %v386
    %s389 = scalar_lea.vmem [#allocation4], 24
    %v390 = vld [vmem:[%s389] sm:$0xff]
    %v391 = vpack.c.bf16 %v388, %v388
    %393 = vrot.lane.b32.xlu0 %v391, 32
    %v394 = vpop.permute.xlu0 %393
    %v396 = vsel %vm168, %v394, 0
    %398 = vmatprep.subr.bf16.mxu0 0
    %399 = vmatpush1.bf16.msra.mxu0 %v164
    %400 = vmatprep.subr.bf16.mxu0 0
    %401 = vmatpush1.bf16.msra.mxu0 %v165
    %402 = vmatprep.subr.bf16.mxu0 0
    %403 = vmatpush1.bf16.msra.mxu0 0
    %404 = vmatprep.subr.bf16.mxu0 0
    %405 = vmatpush1.bf16.msra.mxu0 0
    %406 = vmatprep.subr.bf16.mxu0 0
    %407 = vmatpush1.bf16.msra.mxu0 0
    %408 = vmatprep.subr.bf16.mxu0 0
    %409 = vmatpush1.bf16.msra.mxu0 0
    %410 = vmatprep.subr.bf16.mxu0 0
    %411 = vmatpush1.bf16.msra.mxu0 0
    %412 = vmatprep.subr.bf16.mxu0 0
    %413 = vmatpush1.bf16.msra.mxu0 0
    %414 = vmatprep.subr.bf16.mxu0 0
    %415 = vmatpush1.bf16.msra.mxu0 0
    %416 = vmatprep.subr.bf16.mxu0 0
    %417 = vmatpush1.bf16.msra.mxu0 0
    %418 = vmatprep.subr.bf16.mxu0 0
    %419 = vmatpush1.bf16.msra.mxu0 0
    %420 = vmatprep.subr.bf16.mxu0 0
    %421 = vmatpush1.bf16.msra.mxu0 0
    %422 = vmatprep.subr.bf16.mxu0 0
    %423 = vmatpush1.bf16.msra.mxu0 0
    %424 = vmatprep.subr.bf16.mxu0 0
    %425 = vmatpush1.bf16.msra.mxu0 0
    %426 = vmatprep.subr.bf16.mxu0 0
    %427 = vmatpush1.bf16.msra.mxu0 0
    %428 = vmatprep.subr.bf16.mxu0 0
    %429 = vmatpush1.bf16.msra.mxu0 0
    %430 = vmatprep.mubr.bf16.mxu0 0
    %431 = vmatmul.mubr.bf16.gmra.mrb[0].mxu0 %v396
    %v432 = vpop.f32.mrb[0].mxu0
    %v433 = vadd.f32 0.0, %v432
    %v434 = vpop.f32.mrb[0].mxu0
    %v435 = vpop.f32.mrb[0].mxu0
    %v436 = vpop.f32.mrb[0].mxu0
    %437 = vdwg.mxu0
    %v438 = vadd.f32 %v390, %v433
    %v439 = vxor.u32 %v438, 2147483648
    %v440 = vmul.f32 %v439, 1.442695
    %v441 = vpow.pop %v440
    %v442 = vadd.f32 %v441, 1.0
    %v443 = vrcp.pop %v442
    %v444 = vmul.f32 1.0, %v443
    %v445 = vtanh.pop %v438
    %v446 = vmul.f32 %v444, %v382
    %448 = vrot.lane.b32.xlu0 %v445, 64
    %v449 = vpop.permute.xlu0 %448
    %v451 = vmul.f32 %v444, %v449
    %453 = vrot.lane.b32.xlu0 %v451, 32
    %v454 = vpop.permute.xlu0 %453
    %v456 = vadd.f32 %v446, %v454
    %v457 = vtanh.pop %v456
    %459 = vrot.lane.b32.xlu0 %v457, 64
    %v460 = vpop.permute.xlu0 %459
    %v462 = vmul.f32 %v444, %v460
    %s463 = scalar_lea.vmem [#allocation4], 32
    %v464 = vld [vmem:[%s463] sm:$0xff]
    %v465 = vpack.c.bf16 %v462, %v462
    %467 = vrot.lane.b32.xlu0 %v465, 32
    %v468 = vpop.permute.xlu0 %467
    %v470 = vsel %vm168, %v468, 0
    %472 = vmatprep.subr.bf16.mxu0 0
    %473 = vmatpush1.bf16.msra.mxu0 %v164
    %474 = vmatprep.subr.bf16.mxu0 0
    %475 = vmatpush1.bf16.msra.mxu0 %v165
    %476 = vmatprep.subr.bf16.mxu0 0
    %477 = vmatpush1.bf16.msra.mxu0 0
    %478 = vmatprep.subr.bf16.mxu0 0
    %479 = vmatpush1.bf16.msra.mxu0 0
    %480 = vmatprep.subr.bf16.mxu0 0
    %481 = vmatpush1.bf16.msra.mxu0 0
    %482 = vmatprep.subr.bf16.mxu0 0
    %483 = vmatpush1.bf16.msra.mxu0 0
    %484 = vmatprep.subr.bf16.mxu0 0
    %485 = vmatpush1.bf16.msra.mxu0 0
    %486 = vmatprep.subr.bf16.mxu0 0
    %487 = vmatpush1.bf16.msra.mxu0 0
    %488 = vmatprep.subr.bf16.mxu0 0
    %489 = vmatpush1.bf16.msra.mxu0 0
    %490 = vmatprep.subr.bf16.mxu0 0
    %491 = vmatpush1.bf16.msra.mxu0 0
    %492 = vmatprep.subr.bf16.mxu0 0
    %493 = vmatpush1.bf16.msra.mxu0 0
    %494 = vmatprep.subr.bf16.mxu0 0
    %495 = vmatpush1.bf16.msra.mxu0 0
    %496 = vmatprep.subr.bf16.mxu0 0
    %497 = vmatpush1.bf16.msra.mxu0 0
    %498 = vmatprep.subr.bf16.mxu0 0
    %499 = vmatpush1.bf16.msra.mxu0 0
    %500 = vmatprep.subr.bf16.mxu0 0
    %501 = vmatpush1.bf16.msra.mxu0 0
    %502 = vmatprep.subr.bf16.mxu0 0
    %503 = vmatpush1.bf16.msra.mxu0 0
    %504 = vmatprep.mubr.bf16.mxu0 0
    %505 = vmatmul.mubr.bf16.gmra.mrb[0].mxu0 %v470
    %v506 = vpop.f32.mrb[0].mxu0
    %v507 = vadd.f32 0.0, %v506
    %v508 = vpop.f32.mrb[0].mxu0
    %v509 = vpop.f32.mrb[0].mxu0
    %v510 = vpop.f32.mrb[0].mxu0
    %511 = vdwg.mxu0
    %v512 = vadd.f32 %v464, %v507
    %v513 = vxor.u32 %v512, 2147483648
    %v514 = vmul.f32 %v513, 1.442695
    %v515 = vpow.pop %v514
    %v516 = vadd.f32 %v515, 1.0
    %v517 = vrcp.pop %v516
    %v518 = vmul.f32 1.0, %v517
    %v519 = vtanh.pop %v512
    %v520 = vmul.f32 %v518, %v456
    %522 = vrot.lane.b32.xlu0 %v519, 64
    %v523 = vpop.permute.xlu0 %522
    %v525 = vmul.f32 %v518, %v523
    %527 = vrot.lane.b32.xlu0 %v525, 32
    %v528 = vpop.permute.xlu0 %527
    %v530 = vadd.f32 %v520, %v528
    %v531 = vtanh.pop %v530
    %533 = vrot.lane.b32.xlu0 %v531, 64
    %v534 = vpop.permute.xlu0 %533
    %v536 = vmul.f32 %v518, %v534
    %s537 = scalar_lea.vmem [#allocation4], 40
    %v538 = vld [vmem:[%s537] sm:$0xff]
    %v539 = vpack.c.bf16 %v536, %v536
    %541 = vrot.lane.b32.xlu0 %v539, 32
    %v542 = vpop.permute.xlu0 %541
    %v544 = vsel %vm168, %v542, 0
    %546 = vmatprep.subr.bf16.mxu0 0
    %547 = vmatpush1.bf16.msra.mxu0 %v164
    %548 = vmatprep.subr.bf16.mxu0 0
    %549 = vmatpush1.bf16.msra.mxu0 %v165
    %550 = vmatprep.subr.bf16.mxu0 0
    %551 = vmatpush1.bf16.msra.mxu0 0
    %552 = vmatprep.subr.bf16.mxu0 0
    %553 = vmatpush1.bf16.msra.mxu0 0
    %554 = vmatprep.subr.bf16.mxu0 0
    %555 = vmatpush1.bf16.msra.mxu0 0
    %556 = vmatprep.subr.bf16.mxu0 0
    %557 = vmatpush1.bf16.msra.mxu0 0
    %558 = vmatprep.subr.bf16.mxu0 0
    %559 = vmatpush1.bf16.msra.mxu0 0
    %560 = vmatprep.subr.bf16.mxu0 0
    %561 = vmatpush1.bf16.msra.mxu0 0
    %562 = vmatprep.subr.bf16.mxu0 0
    %563 = vmatpush1.bf16.msra.mxu0 0
    %564 = vmatprep.subr.bf16.mxu0 0
    %565 = vmatpush1.bf16.msra.mxu0 0
    %566 = vmatprep.subr.bf16.mxu0 0
    %567 = vmatpush1.bf16.msra.mxu0 0
    %568 = vmatprep.subr.bf16.mxu0 0
    %569 = vmatpush1.bf16.msra.mxu0 0
    %570 = vmatprep.subr.bf16.mxu0 0
    %571 = vmatpush1.bf16.msra.mxu0 0
    %572 = vmatprep.subr.bf16.mxu0 0
    %573 = vmatpush1.bf16.msra.mxu0 0
    %574 = vmatprep.subr.bf16.mxu0 0
    %575 = vmatpush1.bf16.msra.mxu0 0
    %576 = vmatprep.subr.bf16.mxu0 0
    %577 = vmatpush1.bf16.msra.mxu0 0
    %578 = vmatprep.mubr.bf16.mxu0 0
    %579 = vmatmul.mubr.bf16.gmra.mrb[0].mxu0 %v544
    %v580 = vpop.f32.mrb[0].mxu0
    %v581 = vadd.f32 0.0, %v580
    %v582 = vpop.f32.mrb[0].mxu0
    %v583 = vpop.f32.mrb[0].mxu0
    %v584 = vpop.f32.mrb[0].mxu0
    %585 = vdwg.mxu0
    %v586 = vadd.f32 %v538, %v581
    %v587 = vxor.u32 %v586, 2147483648
    %v588 = vmul.f32 %v587, 1.442695
    %v589 = vpow.pop %v588
    %v590 = vadd.f32 %v589, 1.0
    %v591 = vrcp.pop %v590
    %v592 = vmul.f32 1.0, %v591
    %v593 = vtanh.pop %v586
    %v594 = vmul.f32 %v592, %v530
    %596 = vrot.lane.b32.xlu0 %v593, 64
    %v597 = vpop.permute.xlu0 %596
    %v599 = vmul.f32 %v592, %v597
    %601 = vrot.lane.b32.xlu0 %v599, 32
    %v602 = vpop.permute.xlu0 %601
    %v604 = vadd.f32 %v594, %v602
    %v605 = vtanh.pop %v604
    %607 = vrot.lane.b32.xlu0 %v605, 64
    %v608 = vpop.permute.xlu0 %607
    %v610 = vmul.f32 %v592, %v608
    %s611 = scalar_lea.vmem [#allocation4], 48
    %v612 = vld [vmem:[%s611] sm:$0xff]
    %v613 = vpack.c.bf16 %v610, %v610
    %615 = vrot.lane.b32.xlu0 %v613, 32
    %v616 = vpop.permute.xlu0 %615
    %v618 = vsel %vm168, %v616, 0
    %620 = vmatprep.subr.bf16.mxu0 0
    %621 = vmatpush1.bf16.msra.mxu0 %v164
    %622 = vmatprep.subr.bf16.mxu0 0
    %623 = vmatpush1.bf16.msra.mxu0 %v165
    %624 = vmatprep.subr.bf16.mxu0 0
    %625 = vmatpush1.bf16.msra.mxu0 0
    %626 = vmatprep.subr.bf16.mxu0 0
    %627 = vmatpush1.bf16.msra.mxu0 0
    %628 = vmatprep.subr.bf16.mxu0 0
    %629 = vmatpush1.bf16.msra.mxu0 0
    %630 = vmatprep.subr.bf16.mxu0 0
    %631 = vmatpush1.bf16.msra.mxu0 0
    %632 = vmatprep.subr.bf16.mxu0 0
    %633 = vmatpush1.bf16.msra.mxu0 0
    %634 = vmatprep.subr.bf16.mxu0 0
    %635 = vmatpush1.bf16.msra.mxu0 0
    %636 = vmatprep.subr.bf16.mxu0 0
    %637 = vmatpush1.bf16.msra.mxu0 0
    %638 = vmatprep.subr.bf16.mxu0 0
    %639 = vmatpush1.bf16.msra.mxu0 0
    %640 = vmatprep.subr.bf16.mxu0 0
    %641 = vmatpush1.bf16.msra.mxu0 0
    %642 = vmatprep.subr.bf16.mxu0 0
    %643 = vmatpush1.bf16.msra.mxu0 0
    %644 = vmatprep.subr.bf16.mxu0 0
    %645 = vmatpush1.bf16.msra.mxu0 0
    %646 = vmatprep.subr.bf16.mxu0 0
    %647 = vmatpush1.bf16.msra.mxu0 0
    %648 = vmatprep.subr.bf16.mxu0 0
    %649 = vmatpush1.bf16.msra.mxu0 0
    %650 = vmatprep.subr.bf16.mxu0 0
    %651 = vmatpush1.bf16.msra.mxu0 0
    %652 = vmatprep.mubr.bf16.mxu0 0
    %653 = vmatmul.mubr.bf16.gmra.mrb[0].mxu0 %v618
    %v654 = vpop.f32.mrb[0].mxu0
    %v655 = vadd.f32 0.0, %v654
    %v656 = vpop.f32.mrb[0].mxu0
    %v657 = vpop.f32.mrb[0].mxu0
    %v658 = vpop.f32.mrb[0].mxu0
    %659 = vdwg.mxu0
    %v660 = vadd.f32 %v612, %v655
    %v661 = vxor.u32 %v660, 2147483648
    %v662 = vmul.f32 %v661, 1.442695
    %v663 = vpow.pop %v662
    %v664 = vadd.f32 %v663, 1.0
    %v665 = vrcp.pop %v664
    %v666 = vmul.f32 1.0, %v665
    %v667 = vtanh.pop %v660
    %v668 = vmul.f32 %v666, %v604
    %670 = vrot.lane.b32.xlu0 %v667, 64
    %v671 = vpop.permute.xlu0 %670
    %v673 = vmul.f32 %v666, %v671
    %675 = vrot.lane.b32.xlu0 %v673, 32
    %v676 = vpop.permute.xlu0 %675
    %v678 = vadd.f32 %v668, %v676
    %v679 = vtanh.pop %v678
    %681 = vrot.lane.b32.xlu0 %v679, 64
    %v682 = vpop.permute.xlu0 %681
    %v684 = vmul.f32 %v666, %v682
    %s685 = scalar_lea.vmem [#allocation4], 56
    %v686 = vld [vmem:[%s685] sm:$0xff]
    %v687 = vpack.c.bf16 %v684, %v684
    %689 = vrot.lane.b32.xlu0 %v687, 32
    %v690 = vpop.permute.xlu0 %689
    %v692 = vsel %vm168, %v690, 0
    %694 = vmatprep.subr.bf16.mxu0 0
    %695 = vmatpush1.bf16.msra.mxu0 %v164
    %696 = vmatprep.subr.bf16.mxu0 0
    %697 = vmatpush1.bf16.msra.mxu0 %v165
    %698 = vmatprep.subr.bf16.mxu0 0
    %699 = vmatpush1.bf16.msra.mxu0 0
    %700 = vmatprep.subr.bf16.mxu0 0
    %701 = vmatpush1.bf16.msra.mxu0 0
    %702 = vmatprep.subr.bf16.mxu0 0
    %703 = vmatpush1.bf16.msra.mxu0 0
    %704 = vmatprep.subr.bf16.mxu0 0
    %705 = vmatpush1.bf16.msra.mxu0 0
    %706 = vmatprep.subr.bf16.mxu0 0
    %707 = vmatpush1.bf16.msra.mxu0 0
    %708 = vmatprep.subr.bf16.mxu0 0
    %709 = vmatpush1.bf16.msra.mxu0 0
    %710 = vmatprep.subr.bf16.mxu0 0
    %711 = vmatpush1.bf16.msra.mxu0 0
    %712 = vmatprep.subr.bf16.mxu0 0
    %713 = vmatpush1.bf16.msra.mxu0 0
    %714 = vmatprep.subr.bf16.mxu0 0
    %715 = vmatpush1.bf16.msra.mxu0 0
    %716 = vmatprep.subr.bf16.mxu0 0
    %717 = vmatpush1.bf16.msra.mxu0 0
    %718 = vmatprep.subr.bf16.mxu0 0
    %719 = vmatpush1.bf16.msra.mxu0 0
    %720 = vmatprep.subr.bf16.mxu0 0
    %721 = vmatpush1.bf16.msra.mxu0 0
    %722 = vmatprep.subr.bf16.mxu0 0
    %723 = vmatpush1.bf16.msra.mxu0 0
    %724 = vmatprep.subr.bf16.mxu0 0
    %725 = vmatpush1.bf16.msra.mxu0 0
    %726 = vmatprep.mubr.bf16.mxu0 0
    %727 = vmatmul.mubr.bf16.gmra.mrb[0].mxu0 %v692
    %v728 = vpop.f32.mrb[0].mxu0
    %v729 = vadd.f32 0.0, %v728
    %v730 = vpop.f32.mrb[0].mxu0
    %v731 = vpop.f32.mrb[0].mxu0
    %v732 = vpop.f32.mrb[0].mxu0
    %733 = vdwg.mxu0
    %v734 = vadd.f32 %v686, %v729
    %v735 = vxor.u32 %v734, 2147483648
    %v736 = vmul.f32 %v735, 1.442695
    %v737 = vpow.pop %v736
    %v738 = vadd.f32 %v737, 1.0
    %v739 = vrcp.pop %v738
    %v740 = vmul.f32 1.0, %v739
    %v741 = vtanh.pop %v734
    %v742 = vmul.f32 %v740, %v678
    %744 = vrot.lane.b32.xlu0 %v741, 64
    %v745 = vpop.permute.xlu0 %744
    %v747 = vmul.f32 %v740, %v745
    %749 = vrot.lane.b32.xlu0 %v747, 32
    %v750 = vpop.permute.xlu0 %749
    %v752 = vadd.f32 %v742, %v750
    %v753 = vtanh.pop %v752
    %755 = vrot.lane.b32.xlu0 %v753, 64
    %v756 = vpop.permute.xlu0 %755
    %v758 = vmul.f32 %v740, %v756
    %760 = vrot.lane.b32.xlu0 %v758, 32
    %v761 = vpop.permute.xlu0 %760
    %763 = vst.msk [vmem:[#allocation2] sm:$0xff] %vm168, %v761
    %765 = vrot.lane.b32.xlu0 %v752, 96
    %v766 = vpop.permute.xlu0 %765
    %768 = vst.msk [vmem:[#allocation3] sm:$0xff] %vm168, %v766
    // Predicated region
    $region42: #{tpu_custom_call.1} parent=1 // pred_check
      %p769 = pneg %p44
    $region43: #{tpu_custom_call.1} parent=1 // pred_check_branch
      %771 = sbr.rel (%p769) target = $region45
    $region44: #{tpu_custom_call.1} parent=1 // pred_region
      %v772 = vld [vmem:[#allocation2] sm:$0xff]
      %v773 = vld [vmem:[%s4] sm:$0xff]
      %v774 = vld [vmem:[%s4 + $0x8] sm:$0xff]
      %v775 = vld [vmem:[%s4 + $0x10] sm:$0xff]
      %v776 = vld [vmem:[%s4 + $0x18] sm:$0xff]
      %v777 = vld [vmem:[%s5] sm:$0x1]
      %v779 = vlaneseq
      %v780 = vshrl.u32 %v779, 7
      %v781 = vsub.s32 0, %v780
      %v782 = vrot.slane %v777, %v781
      %v785 = vsel %vm168, %v772, 0
      %787 = vmatprep.subr.mxu0 0.0
      %788 = vmatpush1.msra.mxu0 %v773
      %789 = vmatprep.subr.mxu0 0.0
      %790 = vmatpush1.msra.mxu0 %v774
      %791 = vmatprep.subr.mxu0 0.0
      %792 = vmatpush1.msra.mxu0 %v775
      %793 = vmatprep.subr.mxu0 0.0
      %794 = vmatpush1.msra.mxu0 %v776
      %795 = vmatprep.subr.mxu0 0.0
      %796 = vmatpush1.msra.mxu0 0.0
      %797 = vmatprep.subr.mxu0 0.0
      %798 = vmatpush1.msra.mxu0 0.0
      %799 = vmatprep.subr.mxu0 0.0
      %800 = vmatpush1.msra.mxu0 0.0
      %801 = vmatprep.subr.mxu0 0.0
      %802 = vmatpush1.msra.mxu0 0.0
      %803 = vmatprep.subr.mxu0 0.0
      %804 = vmatpush1.msra.mxu0 0.0
      %805 = vmatprep.subr.mxu0 0.0
      %806 = vmatpush1.msra.mxu0 0.0
      %807 = vmatprep.subr.mxu0 0.0
      %808 = vmatpush1.msra.mxu0 0.0
      %809 = vmatprep.subr.mxu0 0.0
      %810 = vmatpush1.msra.mxu0 0.0
      %811 = vmatprep.subr.mxu0 0.0
      %812 = vmatpush1.msra.mxu0 0.0
      %813 = vmatprep.subr.mxu0 0.0
      %814 = vmatpush1.msra.mxu0 0.0
      %815 = vmatprep.subr.mxu0 0.0
      %816 = vmatpush1.msra.mxu0 0.0
      %817 = vmatprep.subr.mxu0 0.0
      %818 = vmatpush1.msra.mxu0 0.0
      %819 = vmatprep.subr.mxu0 0.0
      %820 = vmatpush1.msra.mxu0 0.0
      %821 = vmatprep.subr.mxu0 0.0
      %822 = vmatpush1.msra.mxu0 0.0
      %823 = vmatprep.subr.mxu0 0.0
      %824 = vmatpush1.msra.mxu0 0.0
      %825 = vmatprep.subr.mxu0 0.0
      %826 = vmatpush1.msra.mxu0 0.0
      %827 = vmatprep.subr.mxu0 0.0
      %828 = vmatpush1.msra.mxu0 0.0
      %829 = vmatprep.subr.mxu0 0.0
      %830 = vmatpush1.msra.mxu0 0.0
      %831 = vmatprep.subr.mxu0 0.0
      %832 = vmatpush1.msra.mxu0 0.0
      %833 = vmatprep.subr.mxu0 0.0
      %834 = vmatpush1.msra.mxu0 0.0
      %835 = vmatprep.subr.mxu0 0.0
      %836 = vmatpush1.msra.mxu0 0.0
      %837 = vmatprep.subr.mxu0 0.0
      %838 = vmatpush1.msra.mxu0 0.0
      %839 = vmatprep.subr.mxu0 0.0
      %840 = vmatpush1.msra.mxu0 0.0
      %841 = vmatprep.subr.mxu0 0.0
      %842 = vmatpush1.msra.mxu0 0.0
      %843 = vmatprep.subr.mxu0 0.0
      %844 = vmatpush1.msra.mxu0 0.0
      %845 = vmatprep.subr.mxu0 0.0
      %846 = vmatpush1.msra.mxu0 0.0
      %847 = vmatprep.subr.mxu0 0.0
      %848 = vmatpush1.msra.mxu0 0.0
      %849 = vmatprep.subr.mxu0 0.0
      %850 = vmatpush1.msra.mxu0 0.0
      %851 = vmatprep.mubr.f32.mxu0 0.0
      %852 = vmatmul.mubr.f32.gmra.mrb[0].mxu0 %v785
      %v853 = vpop.f32.mrb[0].mxu0
      %v854 = vadd.f32 %v782, %v853
      %v855 = vpop.f32.mrb[0].mxu0
      %856 = vdwg.mxu0
      %v857 = vmax.f32 %v854, 0.0
      %v858 = vld [vmem:[%s6] sm:$0xff]
      %v859 = vld [vmem:[%s6 + $0x8] sm:$0xff]
      %v860 = vld [vmem:[%s6 + $0x10] sm:$0xff]
      %v861 = vld [vmem:[%s6 + $0x18] sm:$0xff]
      %v862 = vld [vmem:[#allocation5] sm:$0x1]
      %v864 = vlaneseq
      %v865 = vshrl.u32 %v864, 7
      %v866 = vsub.s32 0, %v865
      %v867 = vrot.slane %v862, %v866
      %v870 = vsel %vm168, %v857, 0
      %872 = vmatprep.subr.mxu0 0.0
      %873 = vmatpush1.msra.mxu0 %v858
      %874 = vmatprep.subr.mxu0 0.0
      %875 = vmatpush1.msra.mxu0 %v859
      %876 = vmatprep.subr.mxu0 0.0
      %877 = vmatpush1.msra.mxu0 %v860
      %878 = vmatprep.subr.mxu0 0.0
      %879 = vmatpush1.msra.mxu0 %v861
      %880 = vmatprep.subr.mxu0 0.0
      %881 = vmatpush1.msra.mxu0 0.0
      %882 = vmatprep.subr.mxu0 0.0
      %883 = vmatpush1.msra.mxu0 0.0
      %884 = vmatprep.subr.mxu0 0.0
      %885 = vmatpush1.msra.mxu0 0.0
      %886 = vmatprep.subr.mxu0 0.0
      %887 = vmatpush1.msra.mxu0 0.0
      %888 = vmatprep.subr.mxu0 0.0
      %889 = vmatpush1.msra.mxu0 0.0
      %890 = vmatprep.subr.mxu0 0.0
      %891 = vmatpush1.msra.mxu0 0.0
      %892 = vmatprep.subr.mxu0 0.0
      %893 = vmatpush1.msra.mxu0 0.0
      %894 = vmatprep.subr.mxu0 0.0
      %895 = vmatpush1.msra.mxu0 0.0
      %896 = vmatprep.subr.mxu0 0.0
      %897 = vmatpush1.msra.mxu0 0.0
      %898 = vmatprep.subr.mxu0 0.0
      %899 = vmatpush1.msra.mxu0 0.0
      %900 = vmatprep.subr.mxu0 0.0
      %901 = vmatpush1.msra.mxu0 0.0
      %902 = vmatprep.subr.mxu0 0.0
      %903 = vmatpush1.msra.mxu0 0.0
      %904 = vmatprep.subr.mxu0 0.0
      %905 = vmatpush1.msra.mxu0 0.0
      %906 = vmatprep.subr.mxu0 0.0
      %907 = vmatpush1.msra.mxu0 0.0
      %908 = vmatprep.subr.mxu0 0.0
      %909 = vmatpush1.msra.mxu0 0.0
      %910 = vmatprep.subr.mxu0 0.0
      %911 = vmatpush1.msra.mxu0 0.0
      %912 = vmatprep.subr.mxu0 0.0
      %913 = vmatpush1.msra.mxu0 0.0
      %914 = vmatprep.subr.mxu0 0.0
      %915 = vmatpush1.msra.mxu0 0.0
      %916 = vmatprep.subr.mxu0 0.0
      %917 = vmatpush1.msra.mxu0 0.0
      %918 = vmatprep.subr.mxu0 0.0
      %919 = vmatpush1.msra.mxu0 0.0
      %920 = vmatprep.subr.mxu0 0.0
      %921 = vmatpush1.msra.mxu0 0.0
      %922 = vmatprep.subr.mxu0 0.0
      %923 = vmatpush1.msra.mxu0 0.0
      %924 = vmatprep.subr.mxu0 0.0
      %925 = vmatpush1.msra.mxu0 0.0
      %926 = vmatprep.subr.mxu0 0.0
      %927 = vmatpush1.msra.mxu0 0.0
      %928 = vmatprep.subr.mxu0 0.0
      %929 = vmatpush1.msra.mxu0 0.0
      %930 = vmatprep.subr.mxu0 0.0
      %931 = vmatpush1.msra.mxu0 0.0
      %932 = vmatprep.subr.mxu0 0.0
      %933 = vmatpush1.msra.mxu0 0.0
      %934 = vmatprep.subr.mxu0 0.0
      %935 = vmatpush1.msra.mxu0 0.0
      %936 = vmatprep.mubr.f32.mxu0 0.0
      %937 = vmatmul.mubr.f32.gmra.mrb[0].mxu0 %v870
      %v938 = vpop.f32.mrb[0].mxu0
      %v939 = vadd.f32 %v867, %v938
      %v940 = vpop.f32.mrb[0].mxu0
      %941 = vdwg.mxu0
      %v942 = vxor.u32 %v939, 2147483648
      %v943 = vmul.f32 %v942, 1.442695
      %v944 = vpow.pop %v943
      %v945 = vadd.f32 %v944, 1.0
      %v946 = vrcp.pop %v945
      %v947 = vmul.f32 1.0, %v946
      %vm948 = vcmask 7168
      %949 = vst.msk [vmem:[%s8] sm:$0xff] %vm948, %v947
    $region45: #{tpu_custom_call.1} parent=1 // pred_fallthru
      _
    // Predicated region
    $region46: #{tpu_custom_call.1} parent=1 // pred_check
      _
    $region47: #{tpu_custom_call.1} parent=1 // pred_check_branch
      %951 = sbr.rel (0) target = $region49
    $region48: #{tpu_custom_call.1} parent=1 // pred_region
      _
    $region49: #{tpu_custom_call.1} parent=1 // pred_fallthru
      _
    // Predicated region
    $region50: #{tpu_custom_call.1} parent=1 // pred_check
      _
    $region51: #{tpu_custom_call.1} parent=1 // pred_check_branch
      %953 = sbr.rel (0) target = $region53
    $region52: #{tpu_custom_call.1} parent=1 // pred_region
      _
    $region53: #{tpu_custom_call.1} parent=1 // pred_fallthru
      _
    %954 = vsyncpa [#allocation7], 1

</llo_original>
